<compile_context>
chip_gen: v7x
topology: tpu7x:2x2x1
jax: 0.10.0
libtpu: 0.0.40
codegen_flags: <defaults>
</compile_context>

<pallas_src>
import functools

import jax
import jax.numpy as jnp
from jax.experimental import pallas as pl
from jax.experimental.pallas import tpu as pltpu


def _round_up(x, m):
    return ((x + m - 1) // m) * m


def _vmem_capacity_bytes():
    try:
        return int(pltpu.get_tpu_info().vmem_capacity_bytes)
    except Exception:
        return 64 * 1024 * 1024  # conservative: v7x per-core VMEM


def prepare_mlp_params(weights, biases, *, mxu_dtype=jnp.bfloat16):
    """One-time parameter prep (do NOT call per forward).

    weights[i]: (in_i, out_i)  -- NOTE: torch nn.Linear stores (out, in);
    transpose when importing from a torch state_dict.
    Weights cast to `mxu_dtype` (bf16 default: full-rate MXU, half the
    resident VMEM); biases kept f32, reshaped to (1, out) for broadcast.
    Feature dims are deliberately NOT padded (the kernel is HBM-bound).
    """
    params = []
    for w, b in zip(weights, biases):
        params.append(jnp.asarray(w).astype(mxu_dtype))
        params.append(jnp.asarray(b).astype(jnp.float32).reshape(1, -1))
    return tuple(params)


def _make_mlp_kernel(num_layers):
    """Kernel refs: (x_tile, w1, b1, ..., wL, bL, out_tile)."""

    def kernel(x_ref, *refs):
        out_ref = refs[-1]
        wb = refs[:-1]
        h = x_ref[...].astype(jnp.float32)                       # (TM, d_in)
        for i in range(num_layers):
            w = wb[2 * i][...]                                   # (d_i, d_{i+1}), bf16
            b = wb[2 * i + 1][...]                               # (1, d_{i+1}), f32
            # MXU operands in the weights' dtype (bf16), f32 accumulation;
            # bias add / ReLU stay in f32.
            h = jnp.dot(h.astype(w.dtype), w,
                        preferred_element_type=jnp.float32) + b
            if i < num_layers - 1:
                h = jnp.maximum(h, 0.0)                          # ReLU
        out_ref[...] = h.astype(out_ref.dtype)

    return kernel


def _vmem_limit_bytes(tile_m, d_in, d_out, params):
    """Size the scoped-VMEM request from the actual working set instead of a
    hard-coded 64 MiB (64 MiB is the ENTIRE physical VMEM of a v7x core)."""
    need = 2 * tile_m * d_in * 4 + 2 * tile_m * d_out * 4   # double-buffered x/out tiles
    widest = d_in
    for i in range(0, len(params), 2):
        w, b = params[i], params[i + 1]
        need += 2 * (w.size * w.dtype.itemsize + b.size * b.dtype.itemsize)
        widest = max(widest, w.shape[1])
    need += 3 * tile_m * widest * 4                          # live intermediates (f32 h, casts)
    cap = _vmem_capacity_bytes()
    return int(min(max(need + (8 << 20), 32 << 20), int(cap * 0.85)))


@functools.partial(jax.jit, static_argnames=("tile_m",))
def _mlp_pallas(x2, params, *, tile_m):
    """x2: (Mp, d_in) f32, Mp % tile_m == 0. params: flat (w, b) * L, prepped."""
    mp, d_in = x2.shape
    num_layers = len(params) // 2
    d_out = params[-2].shape[1]
    grid = (mp // tile_m,)

    in_specs = [pl.BlockSpec((tile_m, d_in), lambda i: (i, 0))]
    flops = 0
    param_bytes = 0
    for li in range(num_layers):
        w = params[2 * li]
        b = params[2 * li + 1]
        # Grid-invariant blocks: same block index every step => fetched once.
        in_specs.append(pl.BlockSpec(w.shape, lambda i: (0, 0)))
        in_specs.append(pl.BlockSpec(b.shape, lambda i: (0, 0)))
        flops += 2 * mp * w.shape[0] * w.shape[1]
        param_bytes += w.size * w.dtype.itemsize + b.size * b.dtype.itemsize

    out_specs = pl.BlockSpec((tile_m, d_out), lambda i: (i, 0))

    bytes_accessed = x2.size * x2.dtype.itemsize + mp * d_out * 4 + param_bytes
    cost = pl.CostEstimate(flops=int(flops), transcendentals=0,
                           bytes_accessed=int(bytes_accessed))

    return pl.pallas_call(
        _make_mlp_kernel(num_layers),
        out_shape=jax.ShapeDtypeStruct((mp, d_out), jnp.float32),
        grid_spec=pltpu.PrefetchScalarGridSpec(
            num_scalar_prefetch=0,
            grid=grid,
            in_specs=in_specs,
            out_specs=out_specs,
        ),
        compiler_params=pltpu.CompilerParams(
            dimension_semantics=("parallel",),
            vmem_limit_bytes=_vmem_limit_bytes(tile_m, d_in, d_out, params),
        ),
        cost_estimate=cost,
    )(x2, *params)


def _choose_row_tiling(m, max_tile_m=1024):
    """Pick (tile_m, padded_rows): large tiles (fewer ~0.35us grid steps),
    small row padding (pure wasted HBM traffic), and >=2 grid steps when it
    costs nothing so the 'parallel' axis can span both v7x TensorCores."""
    m = max(int(m), 1)
    if m <= 8:
        return m, m                              # single block == full extent
    m8 = _round_up(m, 8)
    cands = [t for t in (2048, 1024, 512, 256, 128, 64, 32, 16, 8)
             if t <= max(max_tile_m, 8)]
    tile_m = mp = None
    waste_budget = max(m // 16, 8)
    for t in cands:                              # largest tile first
        cand = _round_up(m8, t)
        if cand - m <= waste_budget:
            tile_m, mp = t, cand
            break
    if tile_m is None:                           # fall back to minimal padding
        best_key = None
        for t in cands:
            cand = _round_up(m8, t)
            key = (cand - m, -t)
            if best_key is None or key < best_key:
                best_key, tile_m, mp = key, t, cand
    while mp // tile_m < 2 and tile_m % 2 == 0 and tile_m >= 16:
        tile_m //= 2                             # split for megacore at no extra padding
    return tile_m, mp


def mlp_forward(x, params, *, max_tile_m=1024):
    """Mirrors MLP.forward: x -> [Linear -> ReLU]*(L-1) -> Linear.

    `params` is the tuple from prepare_mlp_params (prepped ONCE, reused).
    x: (..., input_dim) -> (..., output_dim) in f32.
    """
    num_layers = len(params) // 2
    d_in = params[0].shape[0]
    d_out = params[-2].shape[1]
    assert num_layers >= 1 and x.shape[-1] == d_in

    lead = x.shape[:-1]
    m = 1
    for s in lead:
        m *= s
    x2 = jnp.asarray(x, jnp.float32).reshape(m, d_in)

    tile_m, mp = _choose_row_tiling(m, max_tile_m)
    if mp != m:                                  # rows only; lanes never padded
        x2 = jnp.pad(x2, ((0, mp - m), (0, 0)))

    out = _mlp_pallas(x2, params, tile_m=tile_m)
    if mp != m:
        out = out[:m]
    return out.reshape(*lead, d_out)


def init_mlp_params(key, input_dim, hidden_dim, output_dim, num_layers):
    """PyTorch nn.Linear default init U(-1/sqrt(fan_in), 1/sqrt(fan_in)).
    Weights stored as (in, out) for right-multiplication."""
    h = [hidden_dim] * (num_layers - 1)
    in_dims = [input_dim] + h
    out_dims = h + [output_dim]
    weights, biases = [], []
    for n, k in zip(in_dims, out_dims):
        key, kw, kb = jax.random.split(key, 3)
        bound = 1.0 / float(n) ** 0.5
        weights.append(jax.random.uniform(kw, (n, k), jnp.float32, -bound, bound))
        biases.append(jax.random.uniform(kb, (k,), jnp.float32, -bound, bound))
    return weights, biases


def _mlp_reference(x, weights, biases):
    h = x.astype(jnp.float32)
    num_layers = len(weights)
    for i, (w, b) in enumerate(zip(weights, biases)):
        h = h @ w + b
        if i < num_layers - 1:
            h = jnp.maximum(h, 0.0)
    return h


if __name__ == "__main__":
    # Small shapes consistent with the module.
    B, T = 2, 8
    INPUT_DIM, HIDDEN_DIM, OUTPUT_DIM, NUM_LAYERS = 32, 64, 4, 3

    key = jax.random.PRNGKey(0)
    key, k_x = jax.random.split(key)
    x = jax.random.normal(k_x, (B, T, INPUT_DIM), dtype=jnp.float32)

    weights, biases = init_mlp_params(key, INPUT_DIM, HIDDEN_DIM, OUTPUT_DIM,
                                      NUM_LAYERS)

    # One-time parameter prep (bf16 MXU weights, f32 biases); reuse per call.
    params = prepare_mlp_params(weights, biases)

    out = jax.block_until_ready(mlp_forward(x, params))
    assert out.shape == (B, T, OUTPUT_DIM), out.shape

    ref = jax.block_until_ready(_mlp_reference(x, weights, biases))
    # bf16 MXU operands with f32 accumulation -> slightly loosened tolerance
    # against the pure-f32 reference.
    max_err = float(jnp.max(jnp.abs(out - ref)))
    assert jnp.allclose(out, ref, rtol=2e-2, atol=2e-2), max_err

    print("KERNEL_OK")
</pallas_src>

<mosaic_0001>
module attributes {stable_mosaic.version = 11 : i64} {
  func.func @kernel(%arg0: i32, %arg1: memref<8x32xf32, #tpu.memory_space<vmem>>, %arg2: memref<32x64xbf16, #tpu.memory_space<vmem>>, %arg3: memref<1x64xf32, #tpu.memory_space<vmem>>, %arg4: memref<64x64xbf16, #tpu.memory_space<vmem>>, %arg5: memref<1x64xf32, #tpu.memory_space<vmem>>, %arg6: memref<64x4xbf16, #tpu.memory_space<vmem>>, %arg7: memref<1x4xf32, #tpu.memory_space<vmem>>, %arg8: memref<8x4xf32, #tpu.memory_space<vmem>>) attributes {dimension_semantics = [#tpu.dimension_semantics<parallel>], iteration_bounds = array<i64: 2>, scalar_prefetch = 0 : i64, scratch_operands = 0 : i64, tpu.core_type = #tpu.core_type<tc>, window_params = [{transform_indices = @transform_0, window_bounds = array<i64: 8, 32>}, {pipeline_mode = #tpu.pipeline_mode<synchronous>, transform_indices = @transform_1, window_bounds = array<i64: 32, 64>}, {pipeline_mode = #tpu.pipeline_mode<synchronous>, transform_indices = @transform_2, window_bounds = array<i64: 1, 64>}, {pipeline_mode = #tpu.pipeline_mode<synchronous>, transform_indices = @transform_3, window_bounds = array<i64: 64, 64>}, {pipeline_mode = #tpu.pipeline_mode<synchronous>, transform_indices = @transform_4, window_bounds = array<i64: 1, 64>}, {pipeline_mode = #tpu.pipeline_mode<synchronous>, transform_indices = @transform_5, window_bounds = array<i64: 64, 4>}, {pipeline_mode = #tpu.pipeline_mode<synchronous>, transform_indices = @transform_6, window_bounds = array<i64: 1, 4>}, {transform_indices = @transform_7, window_bounds = array<i64: 8, 4>}]} {
    %c0 = arith.constant 0 : index
    %c0_0 = arith.constant 0 : index
    %0 = vector.load %arg1[%c0, %c0_0] : memref<8x32xf32, #tpu.memory_space<vmem>>, vector<8x32xf32>
    %c0_1 = arith.constant 0 : index
    %c0_2 = arith.constant 0 : index
    %1 = vector.load %arg2[%c0_1, %c0_2] : memref<32x64xbf16, #tpu.memory_space<vmem>>, vector<32x64xbf16>
    %c0_3 = arith.constant 0 : index
    %c0_4 = arith.constant 0 : index
    %2 = vector.load %arg3[%c0_3, %c0_4] : memref<1x64xf32, #tpu.memory_space<vmem>>, vector<1x64xf32>
    %3 = arith.truncf %0 : vector<8x32xf32> to vector<8x32xbf16>
    %cst = arith.constant dense<0.000000e+00> : vector<8x64xf32>
    %4 = tpu.matmul %3, %1, %cst {dimension_numbers = #tpu.dot_dimension_numbers<[1], [0], [0], [1], [0, 0, 1, 1], [], []>} : vector<8x32xbf16>, vector<32x64xbf16>, vector<8x64xf32> -> vector<8x64xf32>
    %5 = vector.broadcast %2 : vector<1x64xf32> to vector<8x64xf32>
    %6 = arith.addf %4, %5 : vector<8x64xf32>
    %cst_5 = arith.constant 0.000000e+00 : f32
    %7 = vector.broadcast %cst_5 : f32 to vector<8x64xf32>
    %8 = arith.maximumf %6, %7 : vector<8x64xf32>
    %c0_6 = arith.constant 0 : index
    %c0_7 = arith.constant 0 : index
    %9 = vector.load %arg4[%c0_6, %c0_7] : memref<64x64xbf16, #tpu.memory_space<vmem>>, vector<64x64xbf16>
    %c0_8 = arith.constant 0 : index
    %c0_9 = arith.constant 0 : index
    %10 = vector.load %arg5[%c0_8, %c0_9] : memref<1x64xf32, #tpu.memory_space<vmem>>, vector<1x64xf32>
    %11 = arith.truncf %8 : vector<8x64xf32> to vector<8x64xbf16>
    %cst_10 = arith.constant dense<0.000000e+00> : vector<8x64xf32>
    %12 = tpu.matmul %11, %9, %cst_10 {dimension_numbers = #tpu.dot_dimension_numbers<[1], [0], [0], [1], [0, 0, 1, 1], [], []>} : vector<8x64xbf16>, vector<64x64xbf16>, vector<8x64xf32> -> vector<8x64xf32>
    %13 = vector.broadcast %10 : vector<1x64xf32> to vector<8x64xf32>
    %14 = arith.addf %12, %13 : vector<8x64xf32>
    %cst_11 = arith.constant 0.000000e+00 : f32
    %15 = vector.broadcast %cst_11 : f32 to vector<8x64xf32>
    %16 = arith.maximumf %14, %15 : vector<8x64xf32>
    %c0_12 = arith.constant 0 : index
    %c0_13 = arith.constant 0 : index
    %17 = vector.load %arg6[%c0_12, %c0_13] : memref<64x4xbf16, #tpu.memory_space<vmem>>, vector<64x4xbf16>
    %c0_14 = arith.constant 0 : index
    %c0_15 = arith.constant 0 : index
    %18 = vector.load %arg7[%c0_14, %c0_15] : memref<1x4xf32, #tpu.memory_space<vmem>>, vector<1x4xf32>
    %19 = arith.truncf %16 : vector<8x64xf32> to vector<8x64xbf16>
    %cst_16 = arith.constant dense<0.000000e+00> : vector<8x4xf32>
    %20 = tpu.matmul %19, %17, %cst_16 {dimension_numbers = #tpu.dot_dimension_numbers<[1], [0], [0], [1], [0, 0, 1, 1], [], []>} : vector<8x64xbf16>, vector<64x4xbf16>, vector<8x4xf32> -> vector<8x4xf32>
    %21 = vector.broadcast %18 : vector<1x4xf32> to vector<8x4xf32>
    %22 = arith.addf %20, %21 : vector<8x4xf32>
    %c0_17 = arith.constant 0 : index
    %c0_18 = arith.constant 0 : index
    %23 = vector.load %arg8[%c0_17, %c0_18] : memref<8x4xf32, #tpu.memory_space<vmem>>, vector<8x4xf32>
    tpu.vector_store %arg8[%c0_17, %c0_18], %22 {strides = array<i32>} : memref<8x4xf32, #tpu.memory_space<vmem>>, vector<8x4xf32>,
    return
  }
  func.func @transform_0(%arg0: i32) -> (i32, i32) {
    %c0_i32 = arith.constant 0 : i32
    %c0_i32_0 = arith.constant 0 : i32
    return %arg0, %c0_i32 : i32, i32
  }
  func.func @transform_1(%arg0: i32) -> (i32, i32) {
    %c0_i32 = arith.constant 0 : i32
    %c0_i32_0 = arith.constant 0 : i32
    %c0_i32_1 = arith.constant 0 : i32
    return %c0_i32, %c0_i32_0 : i32, i32
  }
  func.func @transform_2(%arg0: i32) -> (i32, i32) {
    %c0_i32 = arith.constant 0 : i32
    %c0_i32_0 = arith.constant 0 : i32
    %c0_i32_1 = arith.constant 0 : i32
    return %c0_i32, %c0_i32_0 : i32, i32
  }
  func.func @transform_3(%arg0: i32) -> (i32, i32) {
    %c0_i32 = arith.constant 0 : i32
    %c0_i32_0 = arith.constant 0 : i32
    %c0_i32_1 = arith.constant 0 : i32
    return %c0_i32, %c0_i32_0 : i32, i32
  }
  func.func @transform_4(%arg0: i32) -> (i32, i32) {
    %c0_i32 = arith.constant 0 : i32
    %c0_i32_0 = arith.constant 0 : i32
    %c0_i32_1 = arith.constant 0 : i32
    return %c0_i32, %c0_i32_0 : i32, i32
  }
  func.func @transform_5(%arg0: i32) -> (i32, i32) {
    %c0_i32 = arith.constant 0 : i32
    %c0_i32_0 = arith.constant 0 : i32
    %c0_i32_1 = arith.constant 0 : i32
    return %c0_i32, %c0_i32_0 : i32, i32
  }
  func.func @transform_6(%arg0: i32) -> (i32, i32) {
    %c0_i32 = arith.constant 0 : i32
    %c0_i32_0 = arith.constant 0 : i32
    %c0_i32_1 = arith.constant 0 : i32
    return %c0_i32, %c0_i32_0 : i32, i32
  }
  func.func @transform_7(%arg0: i32) -> (i32, i32) {
    %c0_i32 = arith.constant 0 : i32
    %c0_i32_0 = arith.constant 0 : i32
    return %arg0, %c0_i32 : i32, i32
  }
}

</mosaic_0001>

<llo_original>
// kernel: _mlp_pallas.1
$region0: #{_mlp_pallas.1}
  #allocation0 [shape = 'u32[]', space=smem, size = 0x4, offset = 0x4, fixed_abs, tag = 'smem constant byte address 0x4 - core index']
  #allocation1 [shape = 'u32[144,128]{1,0:T(1,128)}', space=vmem, size = 0x12000, scoped, tag = 'internal scratch']
  %s0 = inlined_call_operand.hbm [shape: f32[16,32], index: 0, kind: input, shape index: {}]
  %s1 = inlined_call_operand.hbm [shape: bf16[32,64], index: 1, kind: input, shape index: {}]
  %s2 = inlined_call_operand.vmem [shape: f32[1,64], index: 2, kind: input, shape index: {}]
  %s3 = inlined_call_operand.vmem [shape: bf16[64,64], index: 3, kind: input, shape index: {}]
  %s4 = inlined_call_operand.vmem [shape: f32[1,64], index: 4, kind: input, shape index: {}]
  %s5 = inlined_call_operand.vmem [shape: bf16[64,4], index: 5, kind: input, shape index: {}]
  %s6 = inlined_call_operand.vmem [shape: f32[1,4], index: 6, kind: input, shape index: {}]
  %s7 = inlined_call_operand.vmem [shape: f32[16,4], index: 7, kind: output, shape index: {}]
  %s8 = sld [smem:[#allocation0]]
  $region69: #{_mlp_pallas.1} parent=0
    _
  %s10 = ssub.s32 1, %s8
  %s11 = scalar_select 0, %s10, %s8
  $region1: #{_mlp_pallas.1} parent=0
    #allocation2 [shape = 'u8[8192]{0}', space=vmem, size = 0x2000, scoped, tag = 'input window, operand 0']
    #allocation3 [shape = 's32[2]{0}', space=sflag, size = 0x8, scoped, tag = 'scoped memory for _mlp_pallas.1']
    #allocation4 [shape = 'u8[8192]{0}', space=vmem, size = 0x2000, scoped, tag = 'input window, operand 1, single buffered']
    #allocation5 [shape = 's32[1]{0}', space=sflag, size = 0x4, scoped, tag = 'scoped memory for _mlp_pallas.1']
    %12 = vsyncpa [#allocation3], 0
    %s13 = scalar_lea.sflag [#allocation3], 1
    %14 = vsyncpa %s13, 0
    %15 = vsyncpa [#allocation5], 0
    loop: start=0, step=1, limit=4
    $region2: #{_mlp_pallas.1} parent=1 // loop_pre_header
      _
    $region3: #{_mlp_pallas.1} parent=1 // loop_header
      %s17 = sphi 0, %s21
      %p18 = scmp.ge.s32.totalorder %s17, 4
      %s27 = sphi 0, %s29
      %s30 = sphi 0, %s27
      %s31 = sphi 0, %s30
      %s47 = sphi 0, %s31
      %s51 = sphi 0, %s51
      %s53 = sphi 0, %s51
      %s54 = sphi 0, %s53
      %s68 = sphi 0, %s54
      %s72 = sphi 0, %s72
      %s74 = sphi 0, %s72
      %s75 = sphi 0, %s74
      %s89 = sphi 0, %s75
      %s93 = sphi 0, %s93
      %s95 = sphi 0, %s93
      %s96 = sphi 0, %s95
      %s110 = sphi 0, %s96
      %s114 = sphi 0, %s114
      %s116 = sphi 0, %s114
      %s117 = sphi 0, %s116
      %s131 = sphi 0, %s117
      %s135 = sphi 0, %s135
      %s137 = sphi 0, %s135
      %s138 = sphi 0, %s137
      %s152 = sphi 0, %s138
      %s156 = sphi 0, %s156
      %s158 = sphi 0, %s156
      %s159 = sphi 0, %s158
      %s173 = sphi 0, %s159
      %s179 = sphi 0, %s181
      %s182 = sphi 0, %s179
      %s183 = sphi 0, %s182
      %s199 = sphi 0, %s183
    $region4: #{_mlp_pallas.1} parent=1 // loop_header_branch
      %20 = sbr.rel (%p18) target = $region8
    $region5: #{_mlp_pallas.1} parent=1 // loop_body
      %s22 = ssub.s32 %s17, 1
      %s23 = ssub.s32 %s17, 2
      %s24 = sadd.s32 %s17, 1
      %s25 = ssub.s32 %s17, %s24
      %p26 = scmp.eq.s32.totalorder %s25, 0
      %s28 = sadd.s32 %s27, 1
      %s29 = scalar_select %p26, %s27, %s28
      %p32 = pneg %p26
      %p33 = scmp.eq.s32.totalorder %s17, 1
      %p34 = por %p32, %p33
      %p35 = scmp.ne.s32.totalorder %s27, %s30
      %p36 = scmp.eq.s32.totalorder %s17, 0
      %p37 = por %p35, %p36
      %p38 = scmp.ne.s32.totalorder %s27, %s30
      %p39 = scmp.eq.s32.totalorder %s22, 1
      %p40 = por %p38, %p39
      %p41 = scmp.ne.s32.totalorder %s30, %s31
      %p42 = scmp.eq.s32.totalorder %s22, 0
      %p43 = por %p41, %p42
      %p44 = scmp.ne.s32.totalorder %s30, %s31
      %p45 = scmp.eq.s32.totalorder %s23, 1
      %p46 = por %p44, %p45
      %p48 = scmp.ne.s32.totalorder %s31, %s47
      %p49 = scmp.eq.s32.totalorder %s23, 0
      %p50 = por %p48, %p49
      %s52 = sadd.s32 %s51, 1
      %p55 = scmp.eq.s32.totalorder %s17, 1
      %p56 = scmp.ne.s32.totalorder %s51, %s53
      %p57 = scmp.eq.s32.totalorder %s17, 0
      %p58 = por %p56, %p57
      %p59 = scmp.ne.s32.totalorder %s51, %s53
      %p60 = scmp.eq.s32.totalorder %s22, 1
      %p61 = por %p59, %p60
      %p62 = scmp.ne.s32.totalorder %s53, %s54
      %p63 = scmp.eq.s32.totalorder %s22, 0
      %p64 = por %p62, %p63
      %p65 = scmp.ne.s32.totalorder %s53, %s54
      %p66 = scmp.eq.s32.totalorder %s23, 1
      %p67 = por %p65, %p66
      %p69 = scmp.ne.s32.totalorder %s54, %s68
      %p70 = scmp.eq.s32.totalorder %s23, 0
      %p71 = por %p69, %p70
      %s73 = sadd.s32 %s72, 1
      %p76 = scmp.eq.s32.totalorder %s17, 1
      %p77 = scmp.ne.s32.totalorder %s72, %s74
      %p78 = scmp.eq.s32.totalorder %s17, 0
      %p79 = por %p77, %p78
      %p80 = scmp.ne.s32.totalorder %s72, %s74
      %p81 = scmp.eq.s32.totalorder %s22, 1
      %p82 = por %p80, %p81
      %p83 = scmp.ne.s32.totalorder %s74, %s75
      %p84 = scmp.eq.s32.totalorder %s22, 0
      %p85 = por %p83, %p84
      %p86 = scmp.ne.s32.totalorder %s74, %s75
      %p87 = scmp.eq.s32.totalorder %s23, 1
      %p88 = por %p86, %p87
      %p90 = scmp.ne.s32.totalorder %s75, %s89
      %p91 = scmp.eq.s32.totalorder %s23, 0
      %p92 = por %p90, %p91
      %s94 = sadd.s32 %s93, 1
      %p97 = scmp.eq.s32.totalorder %s17, 1
      %p98 = scmp.ne.s32.totalorder %s93, %s95
      %p99 = scmp.eq.s32.totalorder %s17, 0
      %p100 = por %p98, %p99
      %p101 = scmp.ne.s32.totalorder %s93, %s95
      %p102 = scmp.eq.s32.totalorder %s22, 1
      %p103 = por %p101, %p102
      %p104 = scmp.ne.s32.totalorder %s95, %s96
      %p105 = scmp.eq.s32.totalorder %s22, 0
      %p106 = por %p104, %p105
      %p107 = scmp.ne.s32.totalorder %s95, %s96
      %p108 = scmp.eq.s32.totalorder %s23, 1
      %p109 = por %p107, %p108
      %p111 = scmp.ne.s32.totalorder %s96, %s110
      %p112 = scmp.eq.s32.totalorder %s23, 0
      %p113 = por %p111, %p112
      %s115 = sadd.s32 %s114, 1
      %p118 = scmp.eq.s32.totalorder %s17, 1
      %p119 = scmp.ne.s32.totalorder %s114, %s116
      %p120 = scmp.eq.s32.totalorder %s17, 0
      %p121 = por %p119, %p120
      %p122 = scmp.ne.s32.totalorder %s114, %s116
      %p123 = scmp.eq.s32.totalorder %s22, 1
      %p124 = por %p122, %p123
      %p125 = scmp.ne.s32.totalorder %s116, %s117
      %p126 = scmp.eq.s32.totalorder %s22, 0
      %p127 = por %p125, %p126
      %p128 = scmp.ne.s32.totalorder %s116, %s117
      %p129 = scmp.eq.s32.totalorder %s23, 1
      %p130 = por %p128, %p129
      %p132 = scmp.ne.s32.totalorder %s117, %s131
      %p133 = scmp.eq.s32.totalorder %s23, 0
      %p134 = por %p132, %p133
      %s136 = sadd.s32 %s135, 1
      %p139 = scmp.eq.s32.totalorder %s17, 1
      %p140 = scmp.ne.s32.totalorder %s135, %s137
      %p141 = scmp.eq.s32.totalorder %s17, 0
      %p142 = por %p140, %p141
      %p143 = scmp.ne.s32.totalorder %s135, %s137
      %p144 = scmp.eq.s32.totalorder %s22, 1
      %p145 = por %p143, %p144
      %p146 = scmp.ne.s32.totalorder %s137, %s138
      %p147 = scmp.eq.s32.totalorder %s22, 0
      %p148 = por %p146, %p147
      %p149 = scmp.ne.s32.totalorder %s137, %s138
      %p150 = scmp.eq.s32.totalorder %s23, 1
      %p151 = por %p149, %p150
      %p153 = scmp.ne.s32.totalorder %s138, %s152
      %p154 = scmp.eq.s32.totalorder %s23, 0
      %p155 = por %p153, %p154
      %s157 = sadd.s32 %s156, 1
      %p160 = scmp.eq.s32.totalorder %s17, 1
      %p161 = scmp.ne.s32.totalorder %s156, %s158
      %p162 = scmp.eq.s32.totalorder %s17, 0
      %p163 = por %p161, %p162
      %p164 = scmp.ne.s32.totalorder %s156, %s158
      %p165 = scmp.eq.s32.totalorder %s22, 1
      %p166 = por %p164, %p165
      %p167 = scmp.ne.s32.totalorder %s158, %s159
      %p168 = scmp.eq.s32.totalorder %s22, 0
      %p169 = por %p167, %p168
      %p170 = scmp.ne.s32.totalorder %s158, %s159
      %p171 = scmp.eq.s32.totalorder %s23, 1
      %p172 = por %p170, %p171
      %p174 = scmp.ne.s32.totalorder %s159, %s173
      %p175 = scmp.eq.s32.totalorder %s23, 0
      %p176 = por %p174, %p175
      %s177 = ssub.s32 %s17, %s24
      %p178 = scmp.eq.s32.totalorder %s177, 0
      %s180 = sadd.s32 %s179, 1
      %s181 = scalar_select %p178, %s179, %s180
      %p184 = pneg %p178
      %p185 = scmp.eq.s32.totalorder %s17, 1
      %p186 = por %p184, %p185
      %p187 = scmp.ne.s32.totalorder %s179, %s182
      %p188 = scmp.eq.s32.totalorder %s17, 0
      %p189 = por %p187, %p188
      %p190 = scmp.ne.s32.totalorder %s179, %s182
      %p191 = scmp.eq.s32.totalorder %s22, 1
      %p192 = por %p190, %p191
      %p193 = scmp.ne.s32.totalorder %s182, %s183
      %p194 = scmp.eq.s32.totalorder %s22, 0
      %p195 = por %p193, %p194
      %p196 = scmp.ne.s32.totalorder %s182, %s183
      %p197 = scmp.eq.s32.totalorder %s23, 1
      %p198 = por %p196, %p197
      %p200 = scmp.ne.s32.totalorder %s183, %s199
      %p201 = scmp.eq.s32.totalorder %s23, 0
      %p202 = por %p200, %p201
      %p203 = scmp.le.s32.totalorder 1, %s17
      %p204 = scmp.lt.s32.totalorder %s17, 3
      %p205 = pnand %p203, %p204
      %p206 = pneg %p205
      // Predicated region
      $region9: #{_mlp_pallas.1} parent=5 // pred_check
        _
      $region10: #{_mlp_pallas.1} parent=5 // pred_check_branch
        %208 = sbr.rel (%p205) target = $region12
      $region11: #{_mlp_pallas.1} parent=5 // pred_region
        %s209 = ssub.s32 %s17, 1
        // Predicated region
        $region13: #{_mlp_pallas.1} parent=11 // pred_check
          %p210 = pneg %p64
        $region14: #{_mlp_pallas.1} parent=11 // pred_check_branch
          %212 = sbr.rel (%p210) target = $region16
        $region15: #{_mlp_pallas.1} parent=11 // pred_region
          %s214 = ssub.s32 256, 256
          %215 = vsyncadd [#allocation5], %s214
          %s216 = sshll.u32 [#allocation4], 4
          %s217 = int_to_ptr.vmem [resolvable:$true] %s216
          %222 = dma.hbm_to_vmem [thread:$0]  %s1, 256, %s217, [#allocation5], 64, 64, 4
        $region16: #{_mlp_pallas.1} parent=11 // pred_fallthru
          _
        // Predicated region
        $region17: #{_mlp_pallas.1} parent=11 // pred_check
          %p223 = pneg %p85
        $region18: #{_mlp_pallas.1} parent=11 // pred_check_branch
          %225 = sbr.rel (%p223) target = $region20
        $region19: #{_mlp_pallas.1} parent=11 // pred_region
          _
        $region20: #{_mlp_pallas.1} parent=11 // pred_fallthru
          _
        // Predicated region
        $region21: #{_mlp_pallas.1} parent=11 // pred_check
          %p226 = pneg %p106
        $region22: #{_mlp_pallas.1} parent=11 // pred_check_branch
          %228 = sbr.rel (%p226) target = $region24
        $region23: #{_mlp_pallas.1} parent=11 // pred_region
          _
        $region24: #{_mlp_pallas.1} parent=11 // pred_fallthru
          _
        // Predicated region
        $region25: #{_mlp_pallas.1} parent=11 // pred_check
          %p229 = pneg %p127
        $region26: #{_mlp_pallas.1} parent=11 // pred_check_branch
          %231 = sbr.rel (%p229) target = $region28
        $region27: #{_mlp_pallas.1} parent=11 // pred_region
          _
        $region28: #{_mlp_pallas.1} parent=11 // pred_fallthru
          _
        // Predicated region
        $region29: #{_mlp_pallas.1} parent=11 // pred_check
          %p232 = pneg %p148
        $region30: #{_mlp_pallas.1} parent=11 // pred_check_branch
          %234 = sbr.rel (%p232) target = $region32
        $region31: #{_mlp_pallas.1} parent=11 // pred_region
          _
        $region32: #{_mlp_pallas.1} parent=11 // pred_fallthru
          _
        // Predicated region
        $region33: #{_mlp_pallas.1} parent=11 // pred_check
          %p235 = pneg %p169
        $region34: #{_mlp_pallas.1} parent=11 // pred_check_branch
          %237 = sbr.rel (%p235) target = $region36
        $region35: #{_mlp_pallas.1} parent=11 // pred_region
          _
        $region36: #{_mlp_pallas.1} parent=11 // pred_fallthru
          _
      $region12: #{_mlp_pallas.1} parent=5 // pred_fallthru
        _
      %p238 = scmp.lt.s32.totalorder %s17, 2
      // Predicated region
      $region37: #{_mlp_pallas.1} parent=5 // pred_check
        %p239 = pneg %p238
      $region38: #{_mlp_pallas.1} parent=5 // pred_check_branch
        %241 = sbr.rel (%p239) target = $region40
      $region39: #{_mlp_pallas.1} parent=5 // pred_region
        // Predicated region
        $region41: #{_mlp_pallas.1} parent=39 // pred_check
          %p242 = pneg %p37
        $region42: #{_mlp_pallas.1} parent=39 // pred_check_branch
          %244 = sbr.rel (%p242) target = $region44
        $region43: #{_mlp_pallas.1} parent=39 // pred_region
          %s245 = sand.u32 %s27, 1
          %s246 = scalar_lea.sflag [#allocation3], %s245
          %s247 = sand.u32 %s27, 1
          %s248 = smul.addr %s247, 8
          %s249 = scalar_lea.vmem [#allocation2], %s248
          %s251 = ssub.s32 128, 128
          %252 = vsyncadd %s246, %s251
          %s253 = smul.addr %s17, 128
          %s254 = scalar_lea.hbm %s0, %s253
          %s256 = sshll.u32 %s249, 4
          %s257 = int_to_ptr.vmem [resolvable:$true] %s256
          %259 = dma.hbm_to_vmem [thread:$0]  %s254, 128, %s257, %s246
        $region44: #{_mlp_pallas.1} parent=39 // pred_fallthru
          _
      $region40: #{_mlp_pallas.1} parent=5 // pred_fallthru
        _
      %p260 = scmp.le.s32.totalorder 1, %s17
      %p261 = scmp.lt.s32.totalorder %s17, 3
      %p262 = pnand %p260, %p261
      %p263 = pneg %p262
      // Predicated region
      $region45: #{_mlp_pallas.1} parent=5 // pred_check
        _
      $region46: #{_mlp_pallas.1} parent=5 // pred_check_branch
        %265 = sbr.rel (%p262) target = $region48
      $region47: #{_mlp_pallas.1} parent=5 // pred_region
        %s266 = ssub.s32 %s17, 1
        %s267 = sand.u32 %s30, 1
        %s268 = scalar_lea.sflag [#allocation3], %s267
        %s269 = sand.u32 %s30, 1
        %s270 = smul.addr %s269, 8
        %s271 = scalar_lea.vmem [#allocation2], %s270
        // Predicated region
        $region49: #{_mlp_pallas.1} parent=47 // pred_check
          %p272 = pneg %p43
        $region50: #{_mlp_pallas.1} parent=47 // pred_check_branch
          %274 = sbr.rel (%p272) target = $region52
        $region51: #{_mlp_pallas.1} parent=47 // pred_region
          %275 = dma.done %s268, 128
        $region52: #{_mlp_pallas.1} parent=47 // pred_fallthru
          _
        // Predicated region
        $region53: #{_mlp_pallas.1} parent=47 // pred_check
          %p276 = pneg %p64
        $region54: #{_mlp_pallas.1} parent=47 // pred_check_branch
          %278 = sbr.rel (%p276) target = $region56
        $region55: #{_mlp_pallas.1} parent=47 // pred_region
          %279 = dma.done [#allocation5], 256
        $region56: #{_mlp_pallas.1} parent=47 // pred_fallthru
          _
        %s280 = sand.u32 %s30, 1
        %s281 = scalar_lea.sflag [#allocation3], %s280
        %s282 = sand.u32 %s30, 1
        %s283 = smul.addr %s282, 8
        %s284 = scalar_lea.vmem [#allocation2], %s283
        %p285 = pneg %p43
        %p286 = pneg %p40
        %p287 = pneg %p64
        %p288 = pneg %p61
        %p289 = pneg %p85
        %p290 = pneg %p82
        %p291 = pneg %p106
        %p292 = pneg %p103
        %p293 = pneg %p127
        %p294 = pneg %p124
        %p295 = pneg %p148
        %p296 = pneg %p145
        %p297 = pneg %p169
        %p298 = pneg %p166
        %p299 = pneg %p195
        %p300 = pneg %p192
        %p301 = scmp.lt.s32.totalorder %s22, 1
        %s302 = scalar_select %p301, %s22, 1
        %s303 = smul.addr %s302, 8
        %s304 = scalar_lea.vmem %s7, %s303
        %p305 = scmp.lt.s32.totalorder %s22, 1
        %s306 = scalar_select %p305, %s22, 1
        %s307 = smul.addr %s306, 8
        %s308 = scalar_lea.vmem %s7, %s307
        %v310 = vld [vmem:[%s271] sm:$0xff]
        %v311 = vld [vmem:[#allocation4] sm:$0xf]
        %v312 = vld [vmem:[#allocation4 + $0x4] sm:$0xf]
        %v313 = vld [vmem:[#allocation4 + $0x8] sm:$0xf]
        %v314 = vld [vmem:[#allocation4 + $0xc] sm:$0xf]
        %v315 = vld [vmem:[%s2] sm:$0x1]
        %v316 = vpack.c.bf16 %v310, %v310
        %v318 = vlaneseq
        %v319 = vshrl.u32 %v318, 7
        %v320 = vsub.s32 0, %v319
        %v321 = vrot.slane %v315, %v320
        %v327 = vunpack.c.l.b16 %v311
        %v328 = vunpack.c.l.b16 %v312
        %v329 = vunpack.c.l.b16 %v313
        %v330 = vunpack.c.l.b16 %v314
        %v331 = vpack.c.b16 %v328, %v327
        %v332 = vpack.c.b16 %v330, %v329
        %vm335 = vcmask 261120
        %v337 = vsel %vm335, %v316, 0
        %339 = vmatprep.subr.bf16.mxu0 0
        %340 = vmatpush1.bf16.msra.mxu0 %v331
        %341 = vmatprep.subr.bf16.mxu0 0
        %342 = vmatpush1.bf16.msra.mxu0 %v332
        %343 = vmatprep.subr.bf16.mxu0 0
        %344 = vmatpush1.bf16.msra.mxu0 0
        %345 = vmatprep.subr.bf16.mxu0 0
        %346 = vmatpush1.bf16.msra.mxu0 0
        %347 = vmatprep.subr.bf16.mxu0 0
        %348 = vmatpush1.bf16.msra.mxu0 0
        %349 = vmatprep.subr.bf16.mxu0 0
        %350 = vmatpush1.bf16.msra.mxu0 0
        %351 = vmatprep.subr.bf16.mxu0 0
        %352 = vmatpush1.bf16.msra.mxu0 0
        %353 = vmatprep.subr.bf16.mxu0 0
        %354 = vmatpush1.bf16.msra.mxu0 0
        %355 = vmatprep.subr.bf16.mxu0 0
        %356 = vmatpush1.bf16.msra.mxu0 0
        %357 = vmatprep.subr.bf16.mxu0 0
        %358 = vmatpush1.bf16.msra.mxu0 0
        %359 = vmatprep.subr.bf16.mxu0 0
        %360 = vmatpush1.bf16.msra.mxu0 0
        %361 = vmatprep.subr.bf16.mxu0 0
        %362 = vmatpush1.bf16.msra.mxu0 0
        %363 = vmatprep.subr.bf16.mxu0 0
        %364 = vmatpush1.bf16.msra.mxu0 0
        %365 = vmatprep.subr.bf16.mxu0 0
        %366 = vmatpush1.bf16.msra.mxu0 0
        %367 = vmatprep.subr.bf16.mxu0 0
        %368 = vmatpush1.bf16.msra.mxu0 0
        %369 = vmatprep.subr.bf16.mxu0 0
        %370 = vmatpush1.bf16.msra.mxu0 0
        %371 = vmatprep.mubr.bf16.mxu0 0
        %372 = vmatmul.mubr.bf16.gmra.mrb[0].mxu0 %v337
        %v373 = vpop.f32.mrb[0].mxu0
        %v374 = vadd.f32 %v321, %v373
        %v375 = vpop.f32.mrb[0].mxu0
        %v376 = vpop.f32.mrb[0].mxu0
        %v377 = vpop.f32.mrb[0].mxu0
        %378 = vdwg.mxu0
        %v379 = vmax.f32 %v374, 0.0
        %v380 = vld [vmem:[%s3] sm:$0xf]
        %v381 = vld [vmem:[%s3 + $0x4] sm:$0xf]
        %v382 = vld [vmem:[%s3 + $0x8] sm:$0xf]
        %v383 = vld [vmem:[%s3 + $0xc] sm:$0xf]
        %v384 = vld [vmem:[%s3 + $0x10] sm:$0xf]
        %v385 = vld [vmem:[%s3 + $0x14] sm:$0xf]
        %v386 = vld [vmem:[%s3 + $0x18] sm:$0xf]
        %v387 = vld [vmem:[%s3 + $0x1c] sm:$0xf]
        %v388 = vld [vmem:[%s4] sm:$0x1]
        %v389 = vpack.c.bf16 %v379, %v379
        %v391 = vlaneseq
        %v392 = vshrl.u32 %v391, 7
        %v393 = vsub.s32 0, %v392
        %v394 = vrot.slane %v388, %v393
        %v404 = vunpack.c.l.b16 %v380
        %v405 = vunpack.c.l.b16 %v381
        %v406 = vunpack.c.l.b16 %v382
        %v407 = vunpack.c.l.b16 %v383
        %v408 = vunpack.c.l.b16 %v384
        %v409 = vunpack.c.l.b16 %v385
        %v410 = vunpack.c.l.b16 %v386
        %v411 = vunpack.c.l.b16 %v387
        %v412 = vpack.c.b16 %v405, %v404
        %v413 = vpack.c.b16 %v407, %v406
        %v414 = vpack.c.b16 %v409, %v408
        %v415 = vpack.c.b16 %v411, %v410
        %vm420 = vcmask 523264
        %v422 = vsel %vm420, %v389, 0
        %424 = vmatprep.subr.bf16.mxu0 0
        %425 = vmatpush1.bf16.msra.mxu0 %v412
        %426 = vmatprep.subr.bf16.mxu0 0
        %427 = vmatpush1.bf16.msra.mxu0 %v413
        %428 = vmatprep.subr.bf16.mxu0 0
        %429 = vmatpush1.bf16.msra.mxu0 %v414
        %430 = vmatprep.subr.bf16.mxu0 0
        %431 = vmatpush1.bf16.msra.mxu0 %v415
        %432 = vmatprep.subr.bf16.mxu0 0
        %433 = vmatpush1.bf16.msra.mxu0 0
        %434 = vmatprep.subr.bf16.mxu0 0
        %435 = vmatpush1.bf16.msra.mxu0 0
        %436 = vmatprep.subr.bf16.mxu0 0
        %437 = vmatpush1.bf16.msra.mxu0 0
        %438 = vmatprep.subr.bf16.mxu0 0
        %439 = vmatpush1.bf16.msra.mxu0 0
        %440 = vmatprep.subr.bf16.mxu0 0
        %441 = vmatpush1.bf16.msra.mxu0 0
        %442 = vmatprep.subr.bf16.mxu0 0
        %443 = vmatpush1.bf16.msra.mxu0 0
        %444 = vmatprep.subr.bf16.mxu0 0
        %445 = vmatpush1.bf16.msra.mxu0 0
        %446 = vmatprep.subr.bf16.mxu0 0
        %447 = vmatpush1.bf16.msra.mxu0 0
        %448 = vmatprep.subr.bf16.mxu0 0
        %449 = vmatpush1.bf16.msra.mxu0 0
        %450 = vmatprep.subr.bf16.mxu0 0
        %451 = vmatpush1.bf16.msra.mxu0 0
        %452 = vmatprep.subr.bf16.mxu0 0
        %453 = vmatpush1.bf16.msra.mxu0 0
        %454 = vmatprep.subr.bf16.mxu0 0
        %455 = vmatpush1.bf16.msra.mxu0 0
        %456 = vmatprep.mubr.bf16.mxu0 0
        %457 = vmatmul.mubr.bf16.gmra.mrb[0].mxu0 %v422
        %v458 = vpop.f32.mrb[0].mxu0
        %v459 = vadd.f32 %v394, %v458
        %v460 = vpop.f32.mrb[0].mxu0
        %v461 = vpop.f32.mrb[0].mxu0
        %v462 = vpop.f32.mrb[0].mxu0
        %463 = vdwg.mxu0
        %v464 = vmax.f32 %v459, 0.0
        %v465 = vld [vmem:[%s5] sm:$0xf]
        %v466 = vld [vmem:[%s5 + $0x4] sm:$0xf]
        %v467 = vld [vmem:[%s5 + $0x8] sm:$0xf]
        %v468 = vld [vmem:[%s5 + $0xc] sm:$0xf]
        %v469 = vld [vmem:[%s5 + $0x10] sm:$0xf]
        %v470 = vld [vmem:[%s5 + $0x14] sm:$0xf]
        %v471 = vld [vmem:[%s5 + $0x18] sm:$0xf]
        %v472 = vld [vmem:[%s5 + $0x1c] sm:$0xf]
        %v473 = vld [vmem:[%s6] sm:$0x1]
        %v474 = vpack.c.bf16 %v464, %v464
        %v476 = vlaneseq
        %v477 = vshrl.u32 %v476, 7
        %v478 = vsub.s32 0, %v477
        %v479 = vrot.slane %v473, %v478
        %v489 = vunpack.c.l.b16 %v465
        %v490 = vunpack.c.l.b16 %v466
        %v491 = vunpack.c.l.b16 %v467
        %v492 = vunpack.c.l.b16 %v468
        %v493 = vunpack.c.l.b16 %v469
        %v494 = vunpack.c.l.b16 %v470
        %v495 = vunpack.c.l.b16 %v471
        %v496 = vunpack.c.l.b16 %v472
        %v497 = vpack.c.b16 %v490, %v489
        %v498 = vpack.c.b16 %v492, %v491
        %v499 = vpack.c.b16 %v494, %v493
        %v500 = vpack.c.b16 %v496, %v495
        %v506 = vsel %vm420, %v474, 0
        %508 = vmatprep.subr.bf16.mxu0 0
        %509 = vmatpush1.bf16.msra.mxu0 %v497
        %510 = vmatprep.subr.bf16.mxu0 0
        %511 = vmatpush1.bf16.msra.mxu0 %v498
        %512 = vmatprep.subr.bf16.mxu0 0
        %513 = vmatpush1.bf16.msra.mxu0 %v499
        %514 = vmatprep.subr.bf16.mxu0 0
        %515 = vmatpush1.bf16.msra.mxu0 %v500
        %516 = vmatprep.subr.bf16.mxu0 0
        %517 = vmatpush1.bf16.msra.mxu0 0
        %518 = vmatprep.subr.bf16.mxu0 0
        %519 = vmatpush1.bf16.msra.mxu0 0
        %520 = vmatprep.subr.bf16.mxu0 0
        %521 = vmatpush1.bf16.msra.mxu0 0
        %522 = vmatprep.subr.bf16.mxu0 0
        %523 = vmatpush1.bf16.msra.mxu0 0
        %524 = vmatprep.subr.bf16.mxu0 0
        %525 = vmatpush1.bf16.msra.mxu0 0
        %526 = vmatprep.subr.bf16.mxu0 0
        %527 = vmatpush1.bf16.msra.mxu0 0
        %528 = vmatprep.subr.bf16.mxu0 0
        %529 = vmatpush1.bf16.msra.mxu0 0
        %530 = vmatprep.subr.bf16.mxu0 0
        %531 = vmatpush1.bf16.msra.mxu0 0
        %532 = vmatprep.subr.bf16.mxu0 0
        %533 = vmatpush1.bf16.msra.mxu0 0
        %534 = vmatprep.subr.bf16.mxu0 0
        %535 = vmatpush1.bf16.msra.mxu0 0
        %536 = vmatprep.subr.bf16.mxu0 0
        %537 = vmatpush1.bf16.msra.mxu0 0
        %538 = vmatprep.subr.bf16.mxu0 0
        %539 = vmatpush1.bf16.msra.mxu0 0
        %540 = vmatprep.mubr.bf16.mxu0 0
        %541 = vmatmul.mubr.bf16.gmra.mrb[0].mxu0 %v506
        %v542 = vpop.f32.mrb[0].mxu0
        %v543 = vadd.f32 %v479, %v542
        %v544 = vpop.f32.mrb[0].mxu0
        %v545 = vpop.f32.mrb[0].mxu0
        %v546 = vpop.f32.mrb[0].mxu0
        %547 = vdwg.mxu0
        %vm548 = vcmask 31744
        %549 = vst.msk [vmem:[%s308] sm:$0xff] %vm548, %v543
        %p550 = scmp.lt.s32.totalorder %s22, 1
        %s551 = scalar_select %p550, %s22, 1
        %s552 = smul.addr %s551, 8
        %s553 = scalar_lea.vmem %s7, %s552
        // Predicated region
        $region57: #{_mlp_pallas.1} parent=47 // pred_check
          %p554 = pneg %p192
        $region58: #{_mlp_pallas.1} parent=47 // pred_check_branch
          %556 = sbr.rel (%p554) target = $region60
        $region59: #{_mlp_pallas.1} parent=47 // pred_region
          _
        $region60: #{_mlp_pallas.1} parent=47 // pred_fallthru
          _
      $region48: #{_mlp_pallas.1} parent=5 // pred_fallthru
        _
      %p557 = scmp.le.s32.totalorder 2, %s17
      // Predicated region
      $region61: #{_mlp_pallas.1} parent=5 // pred_check
        %p558 = pneg %p557
      $region62: #{_mlp_pallas.1} parent=5 // pred_check_branch
        %560 = sbr.rel (%p558) target = $region64
      $region63: #{_mlp_pallas.1} parent=5 // pred_region
        %s561 = ssub.s32 %s17, 2
        // Predicated region
        $region65: #{_mlp_pallas.1} parent=63 // pred_check
          %p562 = pneg %p198
        $region66: #{_mlp_pallas.1} parent=63 // pred_check_branch
          %564 = sbr.rel (%p562) target = $region68
        $region67: #{_mlp_pallas.1} parent=63 // pred_region
          %p565 = scmp.lt.s32.totalorder %s23, 1
          %s566 = scalar_select %p565, %s23, 1
          %s567 = smul.addr %s566, 8
          %s568 = scalar_lea.vmem %s7, %s567
        $region68: #{_mlp_pallas.1} parent=63 // pred_fallthru
          _
      $region64: #{_mlp_pallas.1} parent=5 // pred_fallthru
        _
    $region6: #{_mlp_pallas.1} parent=1 // loop_footer
      %s21 = sadd.s32 1, %s17
    $region7: #{_mlp_pallas.1} parent=1 // loop_footer_branch
      %16 = sbr.rel target = $region3
    $region8: #{_mlp_pallas.1} parent=1 // loop_exit
      _
    %569 = vsyncpa [#allocation3], 1
    %s570 = scalar_lea.sflag [#allocation3], 1
    %571 = vsyncpa %s570, 1
    %572 = vsyncpa [#allocation5], 1

</llo_original>
